<compile_context>
chip_gen: v5e
topology: v5e:2x2
jax: 0.10.0
libtpu: 0.0.40
codegen_flags: <defaults>
</compile_context>

<pallas_src>
import jax
import jax.numpy as jnp
import numpy as np
from jax.experimental import pallas as pl
from jax.experimental.pallas import tpu as pltpu


def _round_up(x, m):
    return ((x + m - 1) // m) * m


def _critic_kernel(x_ref, w1_ref, b1_ref, w2_ref, b2_ref, o_ref):
    """One batch tile: out_row = relu(x @ W1 + b1) @ w2.T + b2, stored as [1, TB].

    x_ref : [TB, S]  f32  (VMEM, pipelined over the batch grid; a partial tail
                           tile may contain Pallas-padded garbage rows -- every
                           output column depends only on its own row, and the
                           padded columns are discarded in the wrapper)
    w1_ref: [S, H]   f32  (VMEM, grid-invariant -> resident)
    b1_ref: [1, H]   f32  (VMEM, grid-invariant)
    w2_ref: [1, H]   f32  (VMEM, grid-invariant; layer-2 weight as a row)
    b2_ref: [1, 1]   f32  (SMEM scalar)
    o_ref : [1, TB]  f32  (VMEM, lane-dense output row)
    """
    # Layer 1 on the MXU (bf16 operands, f32 accumulation). Casts are cheap VPU
    # work fully hidden under the x-tile DMA pipeline.
    x = x_ref[...].astype(jnp.bfloat16)
    w1 = w1_ref[...].astype(jnp.bfloat16)
    h = jnp.dot(x, w1, preferred_element_type=jnp.float32)          # [TB, H] f32
    h = jnp.maximum(h + b1_ref[...], 0.0)

    # Layer 2 as an NT matmul producing a lane-dense [1, TB] row directly
    # (same shape pattern as decode attention's q @ K^T). This avoids both an
    # N=1 MXU matmul and TB/8 masked [TB, 1] stores in the vector-store slot.
    w2 = w2_ref[...].astype(jnp.bfloat16)                            # [1, H]
    row = jax.lax.dot_general(
        w2, h.astype(jnp.bfloat16),
        dimension_numbers=(((1,), (1,)), ((), ())),
        preferred_element_type=jnp.float32,
    )                                                                # [1, TB]
    o_ref[...] = (row + b2_ref[0, 0]).astype(o_ref.dtype)


def _choose_batch_tile(B, tile_b):
    """Batch rows per grid step (multiple of 8 sublanes)."""
    if B <= tile_b:
        return _round_up(B, 8)                 # single tile for small problems
    # Large B: big tile to amortize per-step overhead, but keep >= 2 grid steps
    # so v7x's two TensorCores both get work (harmless on 1-TC v5e/v6e).
    return _round_up(min(tile_b, (B + 1) // 2), 8)


def critic_forward(x, w1, b1, w2, b2, *, tile_b=8192):
    """x: [B, state_dim] -> [B]  (== Critic.forward(x) of the PyTorch module)."""
    B, S = x.shape
    H = w1.shape[1]
    assert w1.shape == (S, H) and b1.shape == (1, H)
    assert w2.shape == (1, H) and b2.shape == (1, 1)

    out_dtype = x.dtype

    TB = _choose_batch_tile(B, tile_b)
    num_tiles = pl.cdiv(B, TB)

    # Small parameter arrays; keep them f32 (bf16 rounding happens in-kernel).
    w1_c = w1.astype(jnp.float32)
    b1_c = b1.astype(jnp.float32)
    w2_c = w2.astype(jnp.float32)
    b2_c = b2.astype(jnp.float32)

    cost = pl.CostEstimate(
        flops=2 * B * S * H + 2 * B * H,
        transcendentals=0,
        bytes_accessed=B * S * 4 + B * 4 + S * H * 4 + 3 * H * 4 + 4,
    )

    out = pl.pallas_call(
        _critic_kernel,
        out_shape=jax.ShapeDtypeStruct((num_tiles, 1, TB), out_dtype),
        grid_spec=pltpu.PrefetchScalarGridSpec(
            num_scalar_prefetch=0,
            grid=(num_tiles,),
            in_specs=[
                # x: tiled over batch -> double-buffered auto-pipeline; the
                # ragged tail tile is handled by Pallas block padding.
                pl.BlockSpec((TB, S), lambda i: (i, 0)),
                # Weights / biases: constant block index -> fetched once, resident.
                pl.BlockSpec((S, H), lambda i: (0, 0)),
                pl.BlockSpec((1, H), lambda i: (0, 0)),
                pl.BlockSpec((1, H), lambda i: (0, 0)),
                # Single scalar b2 lives in SMEM (no VMEM tile / vreg load).
                pl.BlockSpec(memory_space=pltpu.MemorySpace.SMEM),
            ],
            # Lane-dense output: one [1, TB] row per grid step.
            out_specs=pl.BlockSpec((None, 1, TB), lambda i: (i, 0, 0)),
        ),
        compiler_params=pltpu.CompilerParams(
            # Batch tiles are independent -> shard across both TCs on v7x.
            dimension_semantics=("parallel",),
            # Fits the scoped default on every generation, incl. v7x (64 MiB phys).
            vmem_limit_bytes=32 * 1024 * 1024,
        ),
        cost_estimate=cost,
    )(x, w1_c, b1_c, w2_c, b2_c)

    # squeeze(-1) + drop tail padding: pure layout glue in the wrapper.
    return out.reshape(num_tiles * TB)[:B]


def init_critic_params(key, state_dim, hidden_dim, dtype=jnp.float32):
    """Deterministic init mimicking nn.Linear: U(-1/sqrt(fan_in), 1/sqrt(fan_in))."""
    k1, k2, k3, k4 = jax.random.split(key, 4)
    bound1 = 1.0 / jnp.sqrt(state_dim)
    bound2 = 1.0 / jnp.sqrt(hidden_dim)
    w1 = jax.random.uniform(k1, (state_dim, hidden_dim), dtype, -bound1, bound1)
    b1 = jax.random.uniform(k2, (1, hidden_dim), dtype, -bound1, bound1)
    w2 = jax.random.uniform(k3, (1, hidden_dim), dtype, -bound2, bound2)
    b2 = jax.random.uniform(k4, (1, 1), dtype, -bound2, bound2)
    return w1, b1, w2, b2


if __name__ == "__main__":
    # Shapes consistent with Critic.forward: x is [batch, state_dim].
    batch, state_dim, hidden_dim = 600, 16, 32

    key = jax.random.PRNGKey(0)
    kx, kp = jax.random.split(key)
    x = jax.random.normal(kx, (batch, state_dim), dtype=jnp.float32)
    w1, b1, w2, b2 = init_critic_params(kp, state_dim, hidden_dim)

    # Reference (numpy f32 accumulation) mirroring the kernel's bf16 operand
    # rounding. Note: this deviates from a pure-f32 torch Critic at bf16 level.
    def _bf16(a):
        return np.asarray(jnp.asarray(a).astype(jnp.bfloat16).astype(jnp.float32))

    xn, w1n = _bf16(x), _bf16(w1)
    b1n, w2n, b2n = np.asarray(b1), np.asarray(w2), np.asarray(b2)
    h_ref = np.maximum(xn @ w1n + b1n, 0.0)
    ref = (_bf16(h_ref) @ _bf16(w2n).T)[:, 0] + b2n[0, 0]

    # 1) Default big tile -> single grid step at this small batch (B=600 -> TB=608).
    out = jax.block_until_ready(critic_forward(x, w1, b1, w2, b2))
    assert out.shape == (batch,), out.shape
    np.testing.assert_allclose(np.asarray(out), ref, atol=2e-3, rtol=2e-3)

    # 2) Small tile -> multi-step grid (3 tiles) with a partial tail tile,
    #    exercising the masked-boundary path and megacore-style sharding.
    out2 = jax.block_until_ready(critic_forward(x, w1, b1, w2, b2, tile_b=256))
    assert out2.shape == (batch,), out2.shape
    np.testing.assert_allclose(np.asarray(out2), ref, atol=2e-3, rtol=2e-3)

    print("KERNEL_OK")
</pallas_src>

<mosaic_0001>
module attributes {stable_mosaic.version = 11 : i64} {
  func.func @_critic_kernel(%arg0: i32, %arg1: memref<600x16xf32, #tpu.memory_space<vmem>>, %arg2: memref<16x32xf32, #tpu.memory_space<vmem>>, %arg3: memref<1x32xf32, #tpu.memory_space<vmem>>, %arg4: memref<1x32xf32, #tpu.memory_space<vmem>>, %arg5: memref<1x1xf32, #tpu.memory_space<smem>>, %arg6: memref<1x1x600xf32, #tpu.memory_space<vmem>>) attributes {dimension_semantics = [#tpu.dimension_semantics<parallel>], iteration_bounds = array<i64: 1>, scalar_prefetch = 0 : i64, scratch_operands = 0 : i64, tpu.core_type = #tpu.core_type<tc>, window_params = [{transform_indices = @transform_0, window_bounds = array<i64: 600, 16>}, {pipeline_mode = #tpu.pipeline_mode<synchronous>, transform_indices = @transform_1, window_bounds = array<i64: 16, 32>}, {pipeline_mode = #tpu.pipeline_mode<synchronous>, transform_indices = @transform_2, window_bounds = array<i64: 1, 32>}, {pipeline_mode = #tpu.pipeline_mode<synchronous>, transform_indices = @transform_3, window_bounds = array<i64: 1, 32>}, {transform_indices = @transform_4, window_bounds = array<i64: 1, 1>}, {transform_indices = @transform_5, window_bounds = array<i64: 1, 1, 600>}]} {
    %c0 = arith.constant 0 : index
    %c0_0 = arith.constant 0 : index
    %0 = vector.load %arg1[%c0, %c0_0] : memref<600x16xf32, #tpu.memory_space<vmem>>, vector<600x16xf32>
    %1 = arith.truncf %0 : vector<600x16xf32> to vector<600x16xbf16>
    %c0_1 = arith.constant 0 : index
    %c0_2 = arith.constant 0 : index
    %2 = vector.load %arg2[%c0_1, %c0_2] : memref<16x32xf32, #tpu.memory_space<vmem>>, vector<16x32xf32>
    %3 = arith.truncf %2 : vector<16x32xf32> to vector<16x32xbf16>
    %cst = arith.constant dense<0.000000e+00> : vector<600x32xf32>
    %4 = tpu.matmul %1, %3, %cst {dimension_numbers = #tpu.dot_dimension_numbers<[1], [0], [0], [1], [0, 0, 1, 1], [], []>} : vector<600x16xbf16>, vector<16x32xbf16>, vector<600x32xf32> -> vector<600x32xf32>
    %c0_3 = arith.constant 0 : index
    %c0_4 = arith.constant 0 : index
    %5 = vector.load %arg3[%c0_3, %c0_4] : memref<1x32xf32, #tpu.memory_space<vmem>>, vector<1x32xf32>
    %6 = vector.broadcast %5 : vector<1x32xf32> to vector<600x32xf32>
    %7 = arith.addf %4, %6 : vector<600x32xf32>
    %cst_5 = arith.constant 0.000000e+00 : f32
    %8 = vector.broadcast %cst_5 : f32 to vector<600x32xf32>
    %9 = arith.maximumf %7, %8 : vector<600x32xf32>
    %c0_6 = arith.constant 0 : index
    %c0_7 = arith.constant 0 : index
    %10 = vector.load %arg4[%c0_6, %c0_7] : memref<1x32xf32, #tpu.memory_space<vmem>>, vector<1x32xf32>
    %11 = arith.truncf %10 : vector<1x32xf32> to vector<1x32xbf16>
    %12 = arith.truncf %9 : vector<600x32xf32> to vector<600x32xbf16>
    %cst_8 = arith.constant dense<0.000000e+00> : vector<1x600xf32>
    %13 = tpu.matmul %11, %12, %cst_8 {dimension_numbers = #tpu.dot_dimension_numbers<[1], [1], [0], [0], [0, 0, 1, 0], [], []>} : vector<1x32xbf16>, vector<600x32xbf16>, vector<1x600xf32> -> vector<1x600xf32>
    %c0_9 = arith.constant 0 : index
    %c0_10 = arith.constant 0 : index
    %14 = memref.load %arg5[%c0_9, %c0_10] : memref<1x1xf32, #tpu.memory_space<smem>>
    %15 = vector.broadcast %14 : f32 to vector<1x600xf32>
    %16 = arith.addf %13, %15 : vector<1x600xf32>
    %c0_11 = arith.constant 0 : index
    %c0_12 = arith.constant 0 : index
    %c0_13 = arith.constant 0 : index
    %17 = vector.load %arg6[%c0_11, %c0_12, %c0_13] : memref<1x1x600xf32, #tpu.memory_space<vmem>>, vector<1x1x600xf32>
    %18 = vector.shape_cast %17 : vector<1x1x600xf32> to vector<1x600xf32>
    %19 = vector.shape_cast %16 : vector<1x600xf32> to vector<1x1x600xf32>
    tpu.vector_store %arg6[%c0_11, %c0_12, %c0_13], %19 {strides = array<i32>} : memref<1x1x600xf32, #tpu.memory_space<vmem>>, vector<1x1x600xf32>,
    return
  }
  func.func @transform_0(%arg0: i32) -> (i32, i32) {
    %c0_i32 = arith.constant 0 : i32
    %c0_i32_0 = arith.constant 0 : i32
    return %arg0, %c0_i32 : i32, i32
  }
  func.func @transform_1(%arg0: i32) -> (i32, i32) {
    %c0_i32 = arith.constant 0 : i32
    %c0_i32_0 = arith.constant 0 : i32
    %c0_i32_1 = arith.constant 0 : i32
    return %c0_i32, %c0_i32_0 : i32, i32
  }
  func.func @transform_2(%arg0: i32) -> (i32, i32) {
    %c0_i32 = arith.constant 0 : i32
    %c0_i32_0 = arith.constant 0 : i32
    %c0_i32_1 = arith.constant 0 : i32
    return %c0_i32, %c0_i32_0 : i32, i32
  }
  func.func @transform_3(%arg0: i32) -> (i32, i32) {
    %c0_i32 = arith.constant 0 : i32
    %c0_i32_0 = arith.constant 0 : i32
    %c0_i32_1 = arith.constant 0 : i32
    return %c0_i32, %c0_i32_0 : i32, i32
  }
  func.func @transform_4(%arg0: i32) -> (i32, i32) {
    %c0_i32 = arith.constant 0 : i32
    %c0_i32_0 = arith.constant 0 : i32
    %c0_i32_1 = arith.constant 0 : i32
    return %c0_i32, %c0_i32_0 : i32, i32
  }
  func.func @transform_5(%arg0: i32) -> (i32, i32, i32) {
    %c0_i32 = arith.constant 0 : i32
    %c0_i32_0 = arith.constant 0 : i32
    %c0_i32_1 = arith.constant 0 : i32
    return %arg0, %c0_i32, %c0_i32_0 : i32, i32, i32
  }
}

</mosaic_0001>

<llo_original>
// kernel: tpu_custom_call.1
$region0: #{tpu_custom_call.1}
  #allocation0 [shape = 'u32[]', space=smem, size = 0x4, offset = 0x4, fixed_abs, tag = 'smem constant byte address 0x4 - core index']
  #allocation1 [shape = 'u32[72,128]{1,0:T(1,128)}', space=vmem, size = 0x9000, scoped, tag = 'internal scratch']
  #allocation2 [shape = 'f32[1,1]{1,0:T(1,128)S(6)}', space=smem, size = 0x200, scoped, tag = 'scoped memory for tpu_custom_call.1']
  %s0 = inlined_call_operand.vmem [shape: f32[600,16], index: 0, kind: input, shape index: {}]
  %s1 = inlined_call_operand.vmem [shape: f32[16,32], index: 1, kind: input, shape index: {}]
  %s2 = inlined_call_operand.vmem [shape: f32[1,32], index: 2, kind: input, shape index: {}]
  %s3 = inlined_call_operand.vmem [shape: f32[1,32], index: 3, kind: input, shape index: {}]
  %s4 = inlined_call_operand.<no memory space> [shape: f32[1,1], index: 4, kind: input, shape index: {}]
  %s5 = inlined_call_operand.hbm [shape: f32[1,1,600], index: 5, kind: output, shape index: {}]
  %s6 = sld [smem:[#allocation0]]
  $region30: #{tpu_custom_call.1} parent=0
    _
  %s8 = ssub.s32 1, %s6
  %s9 = scalar_select 0, %s8, %s6
  %10 = sst [smem:[#allocation2]] %s4
  $region1: #{tpu_custom_call.1} parent=0
    #allocation3 [shape = 'u8[2560]{0}', space=vmem, size = 0xc00, scoped, tag = 'output window, operand 0, single buffered']
    #allocation4 [shape = 's32[1]{0}', space=sflag, size = 0x4, scoped, tag = 'scoped memory for tpu_custom_call.1']
    %11 = vsyncpa [#allocation4], 0
    // Predicated region
    $region2: #{tpu_custom_call.1} parent=1 // pred_check
      _
    $region3: #{tpu_custom_call.1} parent=1 // pred_check_branch
      %13 = sbr.rel (0) target = $region5
    $region4: #{tpu_custom_call.1} parent=1 // pred_region
      _
    $region5: #{tpu_custom_call.1} parent=1 // pred_fallthru
      _
    // Predicated region
    $region6: #{tpu_custom_call.1} parent=1 // pred_check
      _
    $region7: #{tpu_custom_call.1} parent=1 // pred_check_branch
      %15 = sbr.rel (0) target = $region9
    $region8: #{tpu_custom_call.1} parent=1 // pred_region
      _
    $region9: #{tpu_custom_call.1} parent=1 // pred_fallthru
      _
    // Predicated region
    $region10: #{tpu_custom_call.1} parent=1 // pred_check
      _
    $region11: #{tpu_custom_call.1} parent=1 // pred_check_branch
      %17 = sbr.rel (0) target = $region13
    $region12: #{tpu_custom_call.1} parent=1 // pred_region
      _
    $region13: #{tpu_custom_call.1} parent=1 // pred_fallthru
      _
    // Predicated region
    $region14: #{tpu_custom_call.1} parent=1 // pred_check
      _
    $region15: #{tpu_custom_call.1} parent=1 // pred_check_branch
      %19 = sbr.rel (0) target = $region17
    $region16: #{tpu_custom_call.1} parent=1 // pred_region
      _
    $region17: #{tpu_custom_call.1} parent=1 // pred_fallthru
      _
    // Predicated region
    $region18: #{tpu_custom_call.1} parent=1 // pred_check
      _
    $region19: #{tpu_custom_call.1} parent=1 // pred_check_branch
      %21 = sbr.rel (0) target = $region21
    $region20: #{tpu_custom_call.1} parent=1 // pred_region
      _
    $region21: #{tpu_custom_call.1} parent=1 // pred_fallthru
      _
    %v23 = vld [vmem:[%s0] sm:$0xff]
    %v24 = vld [vmem:[%s0 + $0x8] sm:$0xff]
    %v25 = vld [vmem:[%s0 + $0x10] sm:$0xff]
    %v26 = vld [vmem:[%s0 + $0x18] sm:$0xff]
    %v27 = vld [vmem:[%s0 + $0x20] sm:$0xff]
    %v28 = vld [vmem:[%s0 + $0x28] sm:$0xff]
    %v29 = vld [vmem:[%s0 + $0x30] sm:$0xff]
    %v30 = vld [vmem:[%s0 + $0x38] sm:$0xff]
    %v31 = vld [vmem:[%s0 + $0x40] sm:$0xff]
    %v32 = vld [vmem:[%s0 + $0x48] sm:$0xff]
    %v33 = vld [vmem:[%s0 + $0x50] sm:$0xff]
    %v34 = vld [vmem:[%s0 + $0x58] sm:$0xff]
    %v35 = vld [vmem:[%s0 + $0x60] sm:$0xff]
    %v36 = vld [vmem:[%s0 + $0x68] sm:$0xff]
    %v37 = vld [vmem:[%s0 + $0x70] sm:$0xff]
    %v38 = vld [vmem:[%s0 + $0x78] sm:$0xff]
    %v39 = vld [vmem:[%s0 + $0x80] sm:$0xff]
    %v40 = vld [vmem:[%s0 + $0x88] sm:$0xff]
    %v41 = vld [vmem:[%s0 + $0x90] sm:$0xff]
    %v42 = vld [vmem:[%s0 + $0x98] sm:$0xff]
    %v43 = vld [vmem:[%s0 + $0xa0] sm:$0xff]
    %v44 = vld [vmem:[%s0 + $0xa8] sm:$0xff]
    %v45 = vld [vmem:[%s0 + $0xb0] sm:$0xff]
    %v46 = vld [vmem:[%s0 + $0xb8] sm:$0xff]
    %v47 = vld [vmem:[%s0 + $0xc0] sm:$0xff]
    %v48 = vld [vmem:[%s0 + $0xc8] sm:$0xff]
    %v49 = vld [vmem:[%s0 + $0xd0] sm:$0xff]
    %v50 = vld [vmem:[%s0 + $0xd8] sm:$0xff]
    %v51 = vld [vmem:[%s0 + $0xe0] sm:$0xff]
    %v52 = vld [vmem:[%s0 + $0xe8] sm:$0xff]
    %v53 = vld [vmem:[%s0 + $0xf0] sm:$0xff]
    %v54 = vld [vmem:[%s0 + $0xf8] sm:$0xff]
    %v55 = vld [vmem:[%s0 + $0x100] sm:$0xff]
    %v56 = vld [vmem:[%s0 + $0x108] sm:$0xff]
    %v57 = vld [vmem:[%s0 + $0x110] sm:$0xff]
    %v58 = vld [vmem:[%s0 + $0x118] sm:$0xff]
    %v59 = vld [vmem:[%s0 + $0x120] sm:$0xff]
    %v60 = vld [vmem:[%s0 + $0x128] sm:$0xff]
    %v61 = vld [vmem:[%s0 + $0x130] sm:$0xff]
    %v62 = vld [vmem:[%s0 + $0x138] sm:$0xff]
    %v63 = vld [vmem:[%s0 + $0x140] sm:$0xff]
    %v64 = vld [vmem:[%s0 + $0x148] sm:$0xff]
    %v65 = vld [vmem:[%s0 + $0x150] sm:$0xff]
    %v66 = vld [vmem:[%s0 + $0x158] sm:$0xff]
    %v67 = vld [vmem:[%s0 + $0x160] sm:$0xff]
    %v68 = vld [vmem:[%s0 + $0x168] sm:$0xff]
    %v69 = vld [vmem:[%s0 + $0x170] sm:$0xff]
    %v70 = vld [vmem:[%s0 + $0x178] sm:$0xff]
    %v71 = vld [vmem:[%s0 + $0x180] sm:$0xff]
    %v72 = vld [vmem:[%s0 + $0x188] sm:$0xff]
    %v73 = vld [vmem:[%s0 + $0x190] sm:$0xff]
    %v74 = vld [vmem:[%s0 + $0x198] sm:$0xff]
    %v75 = vld [vmem:[%s0 + $0x1a0] sm:$0xff]
    %v76 = vld [vmem:[%s0 + $0x1a8] sm:$0xff]
    %v77 = vld [vmem:[%s0 + $0x1b0] sm:$0xff]
    %v78 = vld [vmem:[%s0 + $0x1b8] sm:$0xff]
    %v79 = vld [vmem:[%s0 + $0x1c0] sm:$0xff]
    %v80 = vld [vmem:[%s0 + $0x1c8] sm:$0xff]
    %v81 = vld [vmem:[%s0 + $0x1d0] sm:$0xff]
    %v82 = vld [vmem:[%s0 + $0x1d8] sm:$0xff]
    %v83 = vld [vmem:[%s0 + $0x1e0] sm:$0xff]
    %v84 = vld [vmem:[%s0 + $0x1e8] sm:$0xff]
    %v85 = vld [vmem:[%s0 + $0x1f0] sm:$0xff]
    %v86 = vld [vmem:[%s0 + $0x1f8] sm:$0xff]
    %v87 = vld [vmem:[%s0 + $0x200] sm:$0xff]
    %v88 = vld [vmem:[%s0 + $0x208] sm:$0xff]
    %v89 = vld [vmem:[%s0 + $0x210] sm:$0xff]
    %v90 = vld [vmem:[%s0 + $0x218] sm:$0xff]
    %v91 = vld [vmem:[%s0 + $0x220] sm:$0xff]
    %v92 = vld [vmem:[%s0 + $0x228] sm:$0xff]
    %v93 = vld [vmem:[%s0 + $0x230] sm:$0xff]
    %v94 = vld [vmem:[%s0 + $0x238] sm:$0xff]
    %v95 = vld [vmem:[%s0 + $0x240] sm:$0xff]
    %v96 = vld [vmem:[%s0 + $0x248] sm:$0xff]
    %v97 = vld [vmem:[%s0 + $0x250] sm:$0xff]
    %v98 = vpack.c.bf16 %v24, %v23
    %v99 = vpack.c.bf16 %v26, %v25
    %v100 = vpack.c.bf16 %v28, %v27
    %v101 = vpack.c.bf16 %v30, %v29
    %v102 = vpack.c.bf16 %v32, %v31
    %v103 = vpack.c.bf16 %v34, %v33
    %v104 = vpack.c.bf16 %v36, %v35
    %v105 = vpack.c.bf16 %v38, %v37
    %v106 = vpack.c.bf16 %v40, %v39
    %v107 = vpack.c.bf16 %v42, %v41
    %v108 = vpack.c.bf16 %v44, %v43
    %v109 = vpack.c.bf16 %v46, %v45
    %v110 = vpack.c.bf16 %v48, %v47
    %v111 = vpack.c.bf16 %v50, %v49
    %v112 = vpack.c.bf16 %v52, %v51
    %v113 = vpack.c.bf16 %v54, %v53
    %v114 = vpack.c.bf16 %v56, %v55
    %v115 = vpack.c.bf16 %v58, %v57
    %v116 = vpack.c.bf16 %v60, %v59
    %v117 = vpack.c.bf16 %v62, %v61
    %v118 = vpack.c.bf16 %v64, %v63
    %v119 = vpack.c.bf16 %v66, %v65
    %v120 = vpack.c.bf16 %v68, %v67
    %v121 = vpack.c.bf16 %v70, %v69
    %v122 = vpack.c.bf16 %v72, %v71
    %v123 = vpack.c.bf16 %v74, %v73
    %v124 = vpack.c.bf16 %v76, %v75
    %v125 = vpack.c.bf16 %v78, %v77
    %v126 = vpack.c.bf16 %v80, %v79
    %v127 = vpack.c.bf16 %v82, %v81
    %v128 = vpack.c.bf16 %v84, %v83
    %v129 = vpack.c.bf16 %v86, %v85
    %v130 = vpack.c.bf16 %v88, %v87
    %v131 = vpack.c.bf16 %v90, %v89
    %v132 = vpack.c.bf16 %v92, %v91
    %v133 = vpack.c.bf16 %v94, %v93
    %v134 = vpack.c.bf16 %v96, %v95
    %v135 = vpack.c.bf16 %v97, %v97
    %v136 = vld [vmem:[%s1] sm:$0xff]
    %v137 = vld [vmem:[%s1 + $0x8] sm:$0xff]
    %v138 = vpack.c.bf16 %v137, %v136
    %v139 = vld [vmem:[%s2] sm:$0x1]
    %v141 = vperm.slane %v139, 0
    %vm143 = vcmask 130048
    %v145 = vsel %vm143, %v98, 0
    %v148 = vsel %vm143, %v99, 0
    %v151 = vsel %vm143, %v100, 0
    %v154 = vsel %vm143, %v101, 0
    %v157 = vsel %vm143, %v102, 0
    %v160 = vsel %vm143, %v103, 0
    %v163 = vsel %vm143, %v104, 0
    %v166 = vsel %vm143, %v105, 0
    %v169 = vsel %vm143, %v106, 0
    %v172 = vsel %vm143, %v107, 0
    %v175 = vsel %vm143, %v108, 0
    %v178 = vsel %vm143, %v109, 0
    %v181 = vsel %vm143, %v110, 0
    %v184 = vsel %vm143, %v111, 0
    %v187 = vsel %vm143, %v112, 0
    %v190 = vsel %vm143, %v113, 0
    %v193 = vsel %vm143, %v114, 0
    %v196 = vsel %vm143, %v115, 0
    %v199 = vsel %vm143, %v116, 0
    %v202 = vsel %vm143, %v117, 0
    %v205 = vsel %vm143, %v118, 0
    %v208 = vsel %vm143, %v119, 0
    %v211 = vsel %vm143, %v120, 0
    %v214 = vsel %vm143, %v121, 0
    %v217 = vsel %vm143, %v122, 0
    %v220 = vsel %vm143, %v123, 0
    %v223 = vsel %vm143, %v124, 0
    %v226 = vsel %vm143, %v125, 0
    %v229 = vsel %vm143, %v126, 0
    %v232 = vsel %vm143, %v127, 0
    %v235 = vsel %vm143, %v128, 0
    %v238 = vsel %vm143, %v129, 0
    %v241 = vsel %vm143, %v130, 0
    %v244 = vsel %vm143, %v131, 0
    %v247 = vsel %vm143, %v132, 0
    %v250 = vsel %vm143, %v133, 0
    %v253 = vsel %vm143, %v134, 0
    %v256 = vsel %vm143, %v135, 0
    %258 = vmatpush.bf16.msra.mxu0 0
    %259 = vmatpush.bf16.msra.mxu0 0
    %260 = vmatpush.bf16.msra.mxu0 0
    %261 = vmatpush.bf16.msra.mxu0 0
    %262 = vmatpush.bf16.msra.mxu0 0
    %263 = vmatpush.bf16.msra.mxu0 0
    %264 = vmatpush.bf16.msra.mxu0 0
    %265 = vmatpush.bf16.msra.mxu0 %v138
    %266 = vmatmul.bf16.gmra.mxu0 %v145
    %v267 = vpop.f32.mrf.mxu0
    %v268 = vadd.f32 %v141, %v267
    %v269 = vpop.f32.mrf.mxu0
    %v270 = vadd.f32 %v141, %v269
    %271 = vmatmul.bf16.gmra.mxu0 %v148
    %v272 = vpop.f32.mrf.mxu0
    %v273 = vadd.f32 %v141, %v272
    %v274 = vpop.f32.mrf.mxu0
    %v275 = vadd.f32 %v141, %v274
    %276 = vmatmul.bf16.gmra.mxu0 %v151
    %v277 = vpop.f32.mrf.mxu0
    %v278 = vadd.f32 %v141, %v277
    %v279 = vpop.f32.mrf.mxu0
    %v280 = vadd.f32 %v141, %v279
    %281 = vmatmul.bf16.gmra.mxu0 %v154
    %v282 = vpop.f32.mrf.mxu0
    %v283 = vadd.f32 %v141, %v282
    %v284 = vpop.f32.mrf.mxu0
    %v285 = vadd.f32 %v141, %v284
    %286 = vmatmul.bf16.gmra.mxu0 %v157
    %v287 = vpop.f32.mrf.mxu0
    %v288 = vadd.f32 %v141, %v287
    %v289 = vpop.f32.mrf.mxu0
    %v290 = vadd.f32 %v141, %v289
    %291 = vmatmul.bf16.gmra.mxu0 %v160
    %v292 = vpop.f32.mrf.mxu0
    %v293 = vadd.f32 %v141, %v292
    %v294 = vpop.f32.mrf.mxu0
    %v295 = vadd.f32 %v141, %v294
    %296 = vmatmul.bf16.gmra.mxu0 %v163
    %v297 = vpop.f32.mrf.mxu0
    %v298 = vadd.f32 %v141, %v297
    %v299 = vpop.f32.mrf.mxu0
    %v300 = vadd.f32 %v141, %v299
    %301 = vmatmul.bf16.gmra.mxu0 %v166
    %v302 = vpop.f32.mrf.mxu0
    %v303 = vadd.f32 %v141, %v302
    %v304 = vpop.f32.mrf.mxu0
    %v305 = vadd.f32 %v141, %v304
    %306 = vmatmul.bf16.gmra.mxu0 %v169
    %v307 = vpop.f32.mrf.mxu0
    %v308 = vadd.f32 %v141, %v307
    %v309 = vpop.f32.mrf.mxu0
    %v310 = vadd.f32 %v141, %v309
    %311 = vmatmul.bf16.gmra.mxu0 %v172
    %v312 = vpop.f32.mrf.mxu0
    %v313 = vadd.f32 %v141, %v312
    %v314 = vpop.f32.mrf.mxu0
    %v315 = vadd.f32 %v141, %v314
    %316 = vmatmul.bf16.gmra.mxu0 %v175
    %v317 = vpop.f32.mrf.mxu0
    %v318 = vadd.f32 %v141, %v317
    %v319 = vpop.f32.mrf.mxu0
    %v320 = vadd.f32 %v141, %v319
    %321 = vmatmul.bf16.gmra.mxu0 %v178
    %v322 = vpop.f32.mrf.mxu0
    %v323 = vadd.f32 %v141, %v322
    %v324 = vpop.f32.mrf.mxu0
    %v325 = vadd.f32 %v141, %v324
    %326 = vmatmul.bf16.gmra.mxu0 %v181
    %v327 = vpop.f32.mrf.mxu0
    %v328 = vadd.f32 %v141, %v327
    %v329 = vpop.f32.mrf.mxu0
    %v330 = vadd.f32 %v141, %v329
    %331 = vmatmul.bf16.gmra.mxu0 %v184
    %v332 = vpop.f32.mrf.mxu0
    %v333 = vadd.f32 %v141, %v332
    %v334 = vpop.f32.mrf.mxu0
    %v335 = vadd.f32 %v141, %v334
    %336 = vmatmul.bf16.gmra.mxu0 %v187
    %v337 = vpop.f32.mrf.mxu0
    %v338 = vadd.f32 %v141, %v337
    %v339 = vpop.f32.mrf.mxu0
    %v340 = vadd.f32 %v141, %v339
    %341 = vmatmul.bf16.gmra.mxu0 %v190
    %v342 = vpop.f32.mrf.mxu0
    %v343 = vadd.f32 %v141, %v342
    %v344 = vpop.f32.mrf.mxu0
    %v345 = vadd.f32 %v141, %v344
    %346 = vmatmul.bf16.gmra.mxu0 %v193
    %v347 = vpop.f32.mrf.mxu0
    %v348 = vadd.f32 %v141, %v347
    %v349 = vpop.f32.mrf.mxu0
    %v350 = vadd.f32 %v141, %v349
    %351 = vmatmul.bf16.gmra.mxu0 %v196
    %v352 = vpop.f32.mrf.mxu0
    %v353 = vadd.f32 %v141, %v352
    %v354 = vpop.f32.mrf.mxu0
    %v355 = vadd.f32 %v141, %v354
    %356 = vmatmul.bf16.gmra.mxu0 %v199
    %v357 = vpop.f32.mrf.mxu0
    %v358 = vadd.f32 %v141, %v357
    %v359 = vpop.f32.mrf.mxu0
    %v360 = vadd.f32 %v141, %v359
    %361 = vmatmul.bf16.gmra.mxu0 %v202
    %v362 = vpop.f32.mrf.mxu0
    %v363 = vadd.f32 %v141, %v362
    %v364 = vpop.f32.mrf.mxu0
    %v365 = vadd.f32 %v141, %v364
    %366 = vmatmul.bf16.gmra.mxu0 %v205
    %v367 = vpop.f32.mrf.mxu0
    %v368 = vadd.f32 %v141, %v367
    %v369 = vpop.f32.mrf.mxu0
    %v370 = vadd.f32 %v141, %v369
    %371 = vmatmul.bf16.gmra.mxu0 %v208
    %v372 = vpop.f32.mrf.mxu0
    %v373 = vadd.f32 %v141, %v372
    %v374 = vpop.f32.mrf.mxu0
    %v375 = vadd.f32 %v141, %v374
    %376 = vmatmul.bf16.gmra.mxu0 %v211
    %v377 = vpop.f32.mrf.mxu0
    %v378 = vadd.f32 %v141, %v377
    %v379 = vpop.f32.mrf.mxu0
    %v380 = vadd.f32 %v141, %v379
    %381 = vmatmul.bf16.gmra.mxu0 %v214
    %v382 = vpop.f32.mrf.mxu0
    %v383 = vadd.f32 %v141, %v382
    %v384 = vpop.f32.mrf.mxu0
    %v385 = vadd.f32 %v141, %v384
    %386 = vmatmul.bf16.gmra.mxu0 %v217
    %v387 = vpop.f32.mrf.mxu0
    %v388 = vadd.f32 %v141, %v387
    %v389 = vpop.f32.mrf.mxu0
    %v390 = vadd.f32 %v141, %v389
    %391 = vmatmul.bf16.gmra.mxu0 %v220
    %v392 = vpop.f32.mrf.mxu0
    %v393 = vadd.f32 %v141, %v392
    %v394 = vpop.f32.mrf.mxu0
    %v395 = vadd.f32 %v141, %v394
    %396 = vmatmul.bf16.gmra.mxu0 %v223
    %v397 = vpop.f32.mrf.mxu0
    %v398 = vadd.f32 %v141, %v397
    %v399 = vpop.f32.mrf.mxu0
    %v400 = vadd.f32 %v141, %v399
    %401 = vmatmul.bf16.gmra.mxu0 %v226
    %v402 = vpop.f32.mrf.mxu0
    %v403 = vadd.f32 %v141, %v402
    %v404 = vpop.f32.mrf.mxu0
    %v405 = vadd.f32 %v141, %v404
    %406 = vmatmul.bf16.gmra.mxu0 %v229
    %v407 = vpop.f32.mrf.mxu0
    %v408 = vadd.f32 %v141, %v407
    %v409 = vpop.f32.mrf.mxu0
    %v410 = vadd.f32 %v141, %v409
    %411 = vmatmul.bf16.gmra.mxu0 %v232
    %v412 = vpop.f32.mrf.mxu0
    %v413 = vadd.f32 %v141, %v412
    %v414 = vpop.f32.mrf.mxu0
    %v415 = vadd.f32 %v141, %v414
    %416 = vmatmul.bf16.gmra.mxu0 %v235
    %v417 = vpop.f32.mrf.mxu0
    %v418 = vadd.f32 %v141, %v417
    %v419 = vpop.f32.mrf.mxu0
    %v420 = vadd.f32 %v141, %v419
    %421 = vmatmul.bf16.gmra.mxu0 %v238
    %v422 = vpop.f32.mrf.mxu0
    %v423 = vadd.f32 %v141, %v422
    %v424 = vpop.f32.mrf.mxu0
    %v425 = vadd.f32 %v141, %v424
    %426 = vmatmul.bf16.gmra.mxu0 %v241
    %v427 = vpop.f32.mrf.mxu0
    %v428 = vadd.f32 %v141, %v427
    %v429 = vpop.f32.mrf.mxu0
    %v430 = vadd.f32 %v141, %v429
    %431 = vmatmul.bf16.gmra.mxu0 %v244
    %v432 = vpop.f32.mrf.mxu0
    %v433 = vadd.f32 %v141, %v432
    %v434 = vpop.f32.mrf.mxu0
    %v435 = vadd.f32 %v141, %v434
    %436 = vmatmul.bf16.gmra.mxu0 %v247
    %v437 = vpop.f32.mrf.mxu0
    %v438 = vadd.f32 %v141, %v437
    %v439 = vpop.f32.mrf.mxu0
    %v440 = vadd.f32 %v141, %v439
    %441 = vmatmul.bf16.gmra.mxu0 %v250
    %v442 = vpop.f32.mrf.mxu0
    %v443 = vadd.f32 %v141, %v442
    %v444 = vpop.f32.mrf.mxu0
    %v445 = vadd.f32 %v141, %v444
    %446 = vmatmul.bf16.gmra.mxu0 %v253
    %v447 = vpop.f32.mrf.mxu0
    %v448 = vadd.f32 %v141, %v447
    %v449 = vpop.f32.mrf.mxu0
    %v450 = vadd.f32 %v141, %v449
    %451 = vmatmul.bf16.gmra.mxu0 %v256
    %v452 = vpop.f32.mrf.mxu0
    %v453 = vadd.f32 %v141, %v452
    %v454 = vpop.f32.mrf.mxu0
    %455 = vdwg.mxu0
    %v456 = vmax.f32 %v268, 0.0
    %v457 = vmax.f32 %v270, 0.0
    %v458 = vmax.f32 %v273, 0.0
    %v459 = vmax.f32 %v275, 0.0
    %v460 = vmax.f32 %v278, 0.0
    %v461 = vmax.f32 %v280, 0.0
    %v462 = vmax.f32 %v283, 0.0
    %v463 = vmax.f32 %v285, 0.0
    %v464 = vmax.f32 %v288, 0.0
    %v465 = vmax.f32 %v290, 0.0
    %v466 = vmax.f32 %v293, 0.0
    %v467 = vmax.f32 %v295, 0.0
    %v468 = vmax.f32 %v298, 0.0
    %v469 = vmax.f32 %v300, 0.0
    %v470 = vmax.f32 %v303, 0.0
    %v471 = vmax.f32 %v305, 0.0
    %v472 = vmax.f32 %v308, 0.0
    %v473 = vmax.f32 %v310, 0.0
    %v474 = vmax.f32 %v313, 0.0
    %v475 = vmax.f32 %v315, 0.0
    %v476 = vmax.f32 %v318, 0.0
    %v477 = vmax.f32 %v320, 0.0
    %v478 = vmax.f32 %v323, 0.0
    %v479 = vmax.f32 %v325, 0.0
    %v480 = vmax.f32 %v328, 0.0
    %v481 = vmax.f32 %v330, 0.0
    %v482 = vmax.f32 %v333, 0.0
    %v483 = vmax.f32 %v335, 0.0
    %v484 = vmax.f32 %v338, 0.0
    %v485 = vmax.f32 %v340, 0.0
    %v486 = vmax.f32 %v343, 0.0
    %v487 = vmax.f32 %v345, 0.0
    %v488 = vmax.f32 %v348, 0.0
    %v489 = vmax.f32 %v350, 0.0
    %v490 = vmax.f32 %v353, 0.0
    %v491 = vmax.f32 %v355, 0.0
    %v492 = vmax.f32 %v358, 0.0
    %v493 = vmax.f32 %v360, 0.0
    %v494 = vmax.f32 %v363, 0.0
    %v495 = vmax.f32 %v365, 0.0
    %v496 = vmax.f32 %v368, 0.0
    %v497 = vmax.f32 %v370, 0.0
    %v498 = vmax.f32 %v373, 0.0
    %v499 = vmax.f32 %v375, 0.0
    %v500 = vmax.f32 %v378, 0.0
    %v501 = vmax.f32 %v380, 0.0
    %v502 = vmax.f32 %v383, 0.0
    %v503 = vmax.f32 %v385, 0.0
    %v504 = vmax.f32 %v388, 0.0
    %v505 = vmax.f32 %v390, 0.0
    %v506 = vmax.f32 %v393, 0.0
    %v507 = vmax.f32 %v395, 0.0
    %v508 = vmax.f32 %v398, 0.0
    %v509 = vmax.f32 %v400, 0.0
    %v510 = vmax.f32 %v403, 0.0
    %v511 = vmax.f32 %v405, 0.0
    %v512 = vmax.f32 %v408, 0.0
    %v513 = vmax.f32 %v410, 0.0
    %v514 = vmax.f32 %v413, 0.0
    %v515 = vmax.f32 %v415, 0.0
    %v516 = vmax.f32 %v418, 0.0
    %v517 = vmax.f32 %v420, 0.0
    %v518 = vmax.f32 %v423, 0.0
    %v519 = vmax.f32 %v425, 0.0
    %v520 = vmax.f32 %v428, 0.0
    %v521 = vmax.f32 %v430, 0.0
    %v522 = vmax.f32 %v433, 0.0
    %v523 = vmax.f32 %v435, 0.0
    %v524 = vmax.f32 %v438, 0.0
    %v525 = vmax.f32 %v440, 0.0
    %v526 = vmax.f32 %v443, 0.0
    %v527 = vmax.f32 %v445, 0.0
    %v528 = vmax.f32 %v448, 0.0
    %v529 = vmax.f32 %v450, 0.0
    %v530 = vmax.f32 %v453, 0.0
    %v531 = vld [vmem:[%s3] sm:$0x1]
    %v532 = vpack.c.bf16 %v531, %v531
    %v533 = vpack.c.bf16 %v457, %v456
    %v534 = vpack.c.bf16 %v459, %v458
    %v535 = vpack.c.bf16 %v461, %v460
    %v536 = vpack.c.bf16 %v463, %v462
    %v537 = vpack.c.bf16 %v465, %v464
    %v538 = vpack.c.bf16 %v467, %v466
    %v539 = vpack.c.bf16 %v469, %v468
    %v540 = vpack.c.bf16 %v471, %v470
    %v541 = vpack.c.bf16 %v473, %v472
    %v542 = vpack.c.bf16 %v475, %v474
    %v543 = vpack.c.bf16 %v477, %v476
    %v544 = vpack.c.bf16 %v479, %v478
    %v545 = vpack.c.bf16 %v481, %v480
    %v546 = vpack.c.bf16 %v483, %v482
    %v547 = vpack.c.bf16 %v485, %v484
    %v548 = vpack.c.bf16 %v487, %v486
    %v549 = vpack.c.bf16 %v489, %v488
    %v550 = vpack.c.bf16 %v491, %v490
    %v551 = vpack.c.bf16 %v493, %v492
    %v552 = vpack.c.bf16 %v495, %v494
    %v553 = vpack.c.bf16 %v497, %v496
    %v554 = vpack.c.bf16 %v499, %v498
    %v555 = vpack.c.bf16 %v501, %v500
    %v556 = vpack.c.bf16 %v503, %v502
    %v557 = vpack.c.bf16 %v505, %v504
    %v558 = vpack.c.bf16 %v507, %v506
    %v559 = vpack.c.bf16 %v509, %v508
    %v560 = vpack.c.bf16 %v511, %v510
    %v561 = vpack.c.bf16 %v513, %v512
    %v562 = vpack.c.bf16 %v515, %v514
    %v563 = vpack.c.bf16 %v517, %v516
    %v564 = vpack.c.bf16 %v519, %v518
    %v565 = vpack.c.bf16 %v521, %v520
    %v566 = vpack.c.bf16 %v523, %v522
    %v567 = vpack.c.bf16 %v525, %v524
    %v568 = vpack.c.bf16 %v527, %v526
    %v569 = vpack.c.bf16 %v529, %v528
    %v570 = vpack.c.bf16 %v530, %v530
    %s571 = sld [smem:[#allocation2]]
    %v572 = vstv %s571
    %vm573 = vcmask 261120
    %v575 = vsel %vm573, %v532, 0
    %v578 = vsel %vm573, %v533, 0
    %v581 = vsel %vm573, %v534, 0
    %v584 = vsel %vm573, %v535, 0
    %v587 = vsel %vm573, %v536, 0
    %v590 = vsel %vm573, %v537, 0
    %v593 = vsel %vm573, %v538, 0
    %v596 = vsel %vm573, %v539, 0
    %v599 = vsel %vm573, %v540, 0
    %v602 = vsel %vm573, %v541, 0
    %v605 = vsel %vm573, %v542, 0
    %v608 = vsel %vm573, %v543, 0
    %v611 = vsel %vm573, %v544, 0
    %v614 = vsel %vm573, %v545, 0
    %v617 = vsel %vm573, %v546, 0
    %v620 = vsel %vm573, %v547, 0
    %v623 = vsel %vm573, %v548, 0
    %v626 = vsel %vm573, %v549, 0
    %v629 = vsel %vm573, %v550, 0
    %v632 = vsel %vm573, %v551, 0
    %v635 = vsel %vm573, %v552, 0
    %v638 = vsel %vm573, %v553, 0
    %v641 = vsel %vm573, %v554, 0
    %v644 = vsel %vm573, %v555, 0
    %v647 = vsel %vm573, %v556, 0
    %v650 = vsel %vm573, %v557, 0
    %v653 = vsel %vm573, %v558, 0
    %v656 = vsel %vm573, %v559, 0
    %v659 = vsel %vm573, %v560, 0
    %v662 = vsel %vm573, %v561, 0
    %v665 = vsel %vm573, %v562, 0
    %v668 = vsel %vm573, %v563, 0
    %v671 = vsel %vm573, %v564, 0
    %v674 = vsel %vm573, %v565, 0
    %v677 = vsel %vm573, %v566, 0
    %v680 = vsel %vm573, %v567, 0
    %v683 = vsel %vm573, %v568, 0
    %v686 = vsel %vm573, %v569, 0
    %v689 = vsel %vm573, %v570, 0
    %691 = vmatpush.bf16.xpose.msra.mxu0 %v599
    %692 = vmatpush.bf16.xpose.msra.mxu0 %v596
    %693 = vmatpush.bf16.xpose.msra.mxu0 %v593
    %694 = vmatpush.bf16.xpose.msra.mxu0 %v590
    %695 = vmatpush.bf16.xpose.msra.mxu0 %v587
    %696 = vmatpush.bf16.xpose.msra.mxu0 %v584
    %697 = vmatpush.bf16.xpose.msra.mxu0 %v581
    %698 = vmatpush.bf16.xpose.msra.mxu0 %v578
    %699 = vmatmul.bf16.gmra.mxu0 %v575
    %v700 = vpop.f32.mrf.mxu0
    %v701 = vadd.f32 %v572, %v700
    %v702 = vpop.f32.mrf.mxu0
    %703 = vdwg.mxu0
    %704 = vmatpush.bf16.xpose.msra.mxu0 %v623
    %705 = vmatpush.bf16.xpose.msra.mxu0 %v620
    %706 = vmatpush.bf16.xpose.msra.mxu0 %v617
    %707 = vmatpush.bf16.xpose.msra.mxu0 %v614
    %708 = vmatpush.bf16.xpose.msra.mxu0 %v611
    %709 = vmatpush.bf16.xpose.msra.mxu0 %v608
    %710 = vmatpush.bf16.xpose.msra.mxu0 %v605
    %711 = vmatpush.bf16.xpose.msra.mxu0 %v602
    %712 = vmatmul.bf16.gmra.mxu0 %v575
    %v713 = vpop.f32.mrf.mxu0
    %v714 = vadd.f32 %v572, %v713
    %v715 = vpop.f32.mrf.mxu0
    %716 = vdwg.mxu0
    %717 = vmatpush.bf16.xpose.msra.mxu0 %v647
    %718 = vmatpush.bf16.xpose.msra.mxu0 %v644
    %719 = vmatpush.bf16.xpose.msra.mxu0 %v641
    %720 = vmatpush.bf16.xpose.msra.mxu0 %v638
    %721 = vmatpush.bf16.xpose.msra.mxu0 %v635
    %722 = vmatpush.bf16.xpose.msra.mxu0 %v632
    %723 = vmatpush.bf16.xpose.msra.mxu0 %v629
    %724 = vmatpush.bf16.xpose.msra.mxu0 %v626
    %725 = vmatmul.bf16.gmra.mxu0 %v575
    %v726 = vpop.f32.mrf.mxu0
    %v727 = vadd.f32 %v572, %v726
    %v728 = vpop.f32.mrf.mxu0
    %729 = vdwg.mxu0
    %730 = vmatpush.bf16.xpose.msra.mxu0 %v671
    %731 = vmatpush.bf16.xpose.msra.mxu0 %v668
    %732 = vmatpush.bf16.xpose.msra.mxu0 %v665
    %733 = vmatpush.bf16.xpose.msra.mxu0 %v662
    %734 = vmatpush.bf16.xpose.msra.mxu0 %v659
    %735 = vmatpush.bf16.xpose.msra.mxu0 %v656
    %736 = vmatpush.bf16.xpose.msra.mxu0 %v653
    %737 = vmatpush.bf16.xpose.msra.mxu0 %v650
    %738 = vmatmul.bf16.gmra.mxu0 %v575
    %v739 = vpop.f32.mrf.mxu0
    %v740 = vadd.f32 %v572, %v739
    %v741 = vpop.f32.mrf.mxu0
    %742 = vdwg.mxu0
    %743 = vmatpush.bf16.xpose.msra.mxu0 0
    %744 = vmatpush.bf16.xpose.msra.mxu0 0
    %745 = vmatpush.bf16.xpose.msra.mxu0 %v689
    %746 = vmatpush.bf16.xpose.msra.mxu0 %v686
    %747 = vmatpush.bf16.xpose.msra.mxu0 %v683
    %748 = vmatpush.bf16.xpose.msra.mxu0 %v680
    %749 = vmatpush.bf16.xpose.msra.mxu0 %v677
    %750 = vmatpush.bf16.xpose.msra.mxu0 %v674
    %751 = vmatmul.bf16.gmra.mxu0 %v575
    %v752 = vpop.f32.mrf.mxu0
    %v753 = vadd.f32 %v572, %v752
    %v754 = vpop.f32.mrf.mxu0
    %755 = vdwg.mxu0
    %v761 = vrot.slane %v714, 7
    %v762 = vrot.slane %v727, 6
    %v763 = vrot.slane %v740, 5
    %v764 = vrot.slane %v753, 4
    %vm765 = vcmask 1040384
    %v766 = vsel %vm765, %v701, %v761
    %vm767 = vcmask 1041408
    %v768 = vsel %vm767, %v766, %v762
    %vm769 = vcmask 1043459
    %v770 = vsel %vm769, %v763, %v764
    %vm771 = vcmask 1042432
    %v772 = vsel %vm771, %v768, %v770
    %v774 = vlaneseq
    %vm775 = vcmp.ge.s32.totalorder %v774, 0
    %vm776 = vcmp.lt.s32.totalorder %v774, 600
    %vm777 = vmand %vm775, %vm776
    %778 = vst.msk [vmem:[#allocation3] sm:$0x1f] %vm777, %v772
    // Predicated region
    $region22: #{tpu_custom_call.1} parent=1 // pred_check
      _
    $region23: #{tpu_custom_call.1} parent=1 // pred_check_branch
      %780 = sbr.rel (0) target = $region25
    $region24: #{tpu_custom_call.1} parent=1 // pred_region
      %782 = vsyncadd [#allocation4], 0
      %s784 = sshll.u32 [#allocation3], 4
      %s785 = int_to_ptr.vmem [resolvable:$true] %s784
      %s786 = sshll.u32 %s5, 4
      %s787 = int_to_ptr.hbm [resolvable:$true] %s786
      %789 = dma.vmem_to_hbm [thread:$0]  %s785, 80, %s787, [#allocation4]
    $region25: #{tpu_custom_call.1} parent=1 // pred_fallthru
      _
    // Predicated region
    $region26: #{tpu_custom_call.1} parent=1 // pred_check
      _
    $region27: #{tpu_custom_call.1} parent=1 // pred_check_branch
      %791 = sbr.rel (0) target = $region29
    $region28: #{tpu_custom_call.1} parent=1 // pred_region
      %793 = dma.done [#allocation4], 80
    $region29: #{tpu_custom_call.1} parent=1 // pred_fallthru
      _
    %794 = vsyncpa [#allocation4], 1

</llo_original>
